<compile_context>
chip_gen: v7x
topology: tpu7x:2x2x1
jax: 0.10.0
libtpu: 0.0.40
codegen_flags: <defaults>
</compile_context>

<pallas_src>
import numpy as np
import jax
import jax.numpy as jnp
from jax.experimental import pallas as pl
from jax.experimental.pallas import tpu as pltpu


# ----------------------------------------------------------------------------
# Kernel factory
# ----------------------------------------------------------------------------
def make_unishrink_kernel(H_taps, bc, Hh, Ww, lanes, p_val):
    """Build the kernel, specialized at trace time on the conv taps H, the
    block layout (bc planes of Hh*Ww flattened onto `lanes` lanes) and p."""
    H_np = np.asarray(H_taps, dtype=np.float64)
    kh, kw = H_np.shape
    ph, pw = kh // 2, kw // 2
    L = int(lanes)

    # --- p specialization: even integer p avoids the log/exp chain entirely --
    half = p_val / 2.0
    p_even_int = abs(half - round(half)) < 1e-12 and 1 <= round(half) <= 8
    half_int = int(round(half))

    # --- tap analysis: rank-1 H -> separable row+col passes ------------------
    separable, col_taps, row_taps = False, None, None
    u, sv, vt = np.linalg.svd(H_np)
    if len(sv) == 1 or sv[1] <= 1e-7 * max(sv[0], 1e-30):
        separable = True
        scale = float(np.sqrt(max(sv[0], 0.0)))
        col_taps = [float(v) * scale for v in u[:, 0]]
        row_taps = [float(v) * scale for v in vt[0, :]]

    def kernel(params_ref, row_ref, col_ref, x_ref, o_ref):
        b = params_ref[0]
        a1 = params_ref[1]
        a2 = params_ref[2]
        c = params_ref[3]
        s = params_ref[4]
        q0 = params_ref[5]        # lamb**p (even-int p)  |  p*log(lamb) (general)
        q1 = params_ref[6]        # unused  (even-int p)  |  p/2         (general)

        row_idx = jnp.broadcast_to(row_ref[...], (bc, L))   # (bc, L) int32
        col_idx = jnp.broadcast_to(col_ref[...], (bc, L))

        xs = x_ref[0] - s                                    # (bc, L) lane-dense
        xq = xs * xs

        masks = {}

        def mask(kind, v):
            key = (kind, v)
            if key not in masks:
                idx = col_idx if kind == "c" else row_idx
                masks[key] = idx == v
            return masks[key]

        def rolled(base, d, cache):
            # value at flat position f + d; wrap-around only reaches positions
            # that are overwritten by the boundary selects below.
            if d == 0:
                return base
            if d not in cache:
                cache[d] = pltpu.roll(base, shift=(-d) % L, axis=1)
            return cache[d]

        def col_shift(base, dj, cache):
            # base[r, reflect(col + dj)]
            out = rolled(base, dj, cache)
            edges = range(Ww - dj, Ww) if dj > 0 else range(0, -dj)
            for cc in edges:
                tgt = cc + dj
                src = -tgt if tgt < 0 else 2 * (Ww - 1) - tgt
                out = jnp.where(mask("c", cc), rolled(base, src - cc, cache), out)
            return out

        def row_shift(base, di, cache):
            # base[reflect(row + di), col]
            out = rolled(base, di * Ww, cache)
            edges = range(Hh - di, Hh) if di > 0 else range(0, -di)
            for rr in edges:
                tgt = rr + di
                src = -tgt if tgt < 0 else 2 * (Hh - 1) - tgt
                out = jnp.where(mask("r", rr),
                                rolled(base, (src - rr) * Ww, cache), out)
            return out

        def weighted_sum(planes, weights, bias=None):
            # group equal taps: sum first, multiply once per distinct value
            groups = {}
            for arr, w in zip(planes, weights):
                if w == 0.0:
                    continue
                groups.setdefault(w, []).append(arr)
            total = None
            for w, arrs in groups.items():
                acc_g = arrs[0]
                for a in arrs[1:]:
                    acc_g = acc_g + a
                term = acc_g if w == 1.0 else w * acc_g
                total = term if total is None else total + term
            if total is None:
                total = jnp.zeros_like(xq)
            return total if bias is None else total + bias

        if separable:
            cx = {}
            col_planes = [col_shift(xq, j - pw, cx) for j in range(kw)]
            t = weighted_sum(col_planes, row_taps)
            ct = {}
            row_planes = [row_shift(t, i - ph, ct) for i in range(kh)]
            acc = weighted_sum(row_planes, col_taps, bias=b)
        else:
            cx = {}
            col_planes = {j: col_shift(xq, j - pw, cx) for j in range(kw)}
            row_caches = {j: {} for j in range(kw)}
            planes, weights = [], []
            for i in range(kh):
                for j in range(kw):
                    w = float(H_np[i, j])
                    if w == 0.0:
                        continue
                    planes.append(row_shift(col_planes[j], i - ph, row_caches[j]))
                    weights.append(w)
            acc = weighted_sum(planes, weights, bias=b)

        if p_even_int:
            # m1 = 1 - lamb**p / acc**(p/2); approx EUP reciprocal + one Newton
            inv = pl.reciprocal(acc, approx=True)
            inv = inv * (2.0 - acc * inv)
            powk = inv
            for _ in range(half_int - 1):
                powk = powk * inv
            m1 = 1.0 - q0 * powk
        else:
            # general p: exactly one log + one exp (q0 = p*log(lamb), q1 = p/2)
            # TODO(synk): lamb <= 0 with non-integer p yields NaN -> 'c' branch.
            m1 = 1.0 - jnp.exp(q0 - q1 * jnp.log(acc))

        # Reference (nan_to_num + maximum + a2/m1) collapses to:
        #   acc>0 & m1>0 : xs*m1*(a1 + a2/m1) + c == xs*(a1*m1 + a2) + c
        #   otherwise    : c
        valid = jnp.logical_and(acc > 0.0, m1 > 0.0)
        o_ref[0] = jnp.where(valid, xs * (a1 * m1 + a2) + c, c)

    return kernel


# ----------------------------------------------------------------------------
# Block / VMEM sizing (generation-aware)
# ----------------------------------------------------------------------------
def _vmem_budgets():
    """(per-block working-set budget, Mosaic scoped-VMEM limit) in bytes."""
    cap = 64 << 20                                     # conservative fallback
    try:
        cap = int(pltpu.get_tpu_info().vmem_capacity_bytes)
    except Exception:
        pass
    budget = min(int(cap * 0.45), 64 << 20)            # v7x ~29 MiB, v5e/v6e ~58 MiB
    limit = min(int(cap * 0.75), 100 << 20)            # v7x 48 MiB, v5e/v6e 96 MiB
    return budget, max(limit, 32 << 20)


def _choose_grid(nc, lanes, budget_bytes):
    """Planes-per-block bc, grid size g and plane padding for nc planes of
    `lanes` f32 lanes each.  Prefers sublane-dense bc (multiple of 8) and a
    multi-step grid so both v7x TensorCores get balanced work."""
    per_plane = 4 * lanes * 20 + 4096          # in(x2) + out(x2) + ~16 f32 temps
    bc_cap = min(nc, max(1, budget_bytes // per_plane))
    if bc_cap >= 8:
        bc_cap -= bc_cap % 8                   # sublane-dense blocks
    bc = bc_cap
    for target_g in (8, 6, 4, 2):              # prefer >=4 (even) grid steps ...
        cand = min(-(-nc // target_g), bc_cap)
        if cand >= 8:
            cand -= cand % 8
        if cand >= min(8, bc_cap):             # ... but never go sublane-sparse
            bc = cand
            break
    g = -(-nc // bc)
    pad = g * bc - nc                          # padded planes (non-divisor nc)
    return bc, g, pad


# ----------------------------------------------------------------------------
# Wrapper
# ----------------------------------------------------------------------------
def unishrink_forward(x, H_taps, lamb, b, p, a1, a2, c, s):
    """UniShrinkLayer.forward.  x: (N, C, H, W) float32.  lamb and p are
    Python floats (used for trace-time specialization)."""
    x = jnp.asarray(x, jnp.float32)
    N, C, Hh, Ww = x.shape
    H_np = np.asarray(H_taps, dtype=np.float64)
    kh, kw = H_np.shape
    ph, pw = kh // 2, kw // 2
    assert kh % 2 == 1 and kw % 2 == 1, "odd conv kernel expected"
    assert Hh > ph and Ww > pw, "reflect padding needs spatial dims > pad"

    lamb = float(lamb)
    p_val = float(p)

    L = Hh * Ww
    L_pad = -(-L // 128) * 128                 # lane-align flattened planes
    nc = N * C

    budget, vmem_limit = _vmem_budgets()
    bc, g, plane_pad = _choose_grid(nc, L_pad, budget)

    x_flat = x.reshape(nc, L)
    if L_pad != L:
        x_flat = jnp.pad(x_flat, ((0, 0), (0, L_pad - L)))
    if plane_pad:
        x_flat = jnp.pad(x_flat, ((0, plane_pad), (0, 0)))
    x_blk = x_flat.reshape(g, bc, L_pad)

    # Static per-position row/col indices of the flattened plane (lane padding
    # gets -1 so it never matches a boundary mask).
    rr, cc = np.meshgrid(np.arange(Hh, dtype=np.int32),
                         np.arange(Ww, dtype=np.int32), indexing="ij")
    row_np = np.full((1, L_pad), -1, np.int32)
    col_np = np.full((1, L_pad), -1, np.int32)
    row_np[0, :L] = rr.reshape(-1)
    col_np[0, :L] = cc.reshape(-1)
    row_idx = jnp.asarray(row_np)
    col_idx = jnp.asarray(col_np)

    # Scalar parameters -> SMEM.  q0/q1 encode the p-specialized shrink term.
    half = p_val / 2.0
    p_even_int = abs(half - round(half)) < 1e-12 and 1 <= round(half) <= 8
    if p_even_int:
        q0 = abs(lamb) ** p_val                # lamb**p (even p -> sign-free)
        q1 = 0.0
    else:
        q0 = p_val * float(np.log(lamb)) if lamb > 0 else float("nan")
        q1 = 0.5 * p_val
    params = jnp.array([b, a1, a2, c, s, q0, q1], dtype=jnp.float32)

    kernel = make_unishrink_kernel(H_np, bc, Hh, Ww, L_pad, p_val)

    out = pl.pallas_call(
        kernel,
        out_shape=jax.ShapeDtypeStruct((g, bc, L_pad), jnp.float32),
        grid=(g,),
        in_specs=[
            pl.BlockSpec(memory_space=pltpu.MemorySpace.SMEM),          # params
            pl.BlockSpec((1, L_pad), lambda gi: (0, 0)),                # row idx
            pl.BlockSpec((1, L_pad), lambda gi: (0, 0)),                # col idx
            pl.BlockSpec((1, bc, L_pad), lambda gi: (gi, 0, 0)),        # planes
        ],
        out_specs=pl.BlockSpec((1, bc, L_pad), lambda gi: (gi, 0, 0)),
        compiler_params=pltpu.CompilerParams(
            dimension_semantics=("parallel",),
            vmem_limit_bytes=vmem_limit,
        ),
    )(params, row_idx, col_idx, x_blk)

    out = out.reshape(g * bc, L_pad)[:nc, :L]
    return out.reshape(N, C, Hh, Ww)


# ----------------------------------------------------------------------------
# Pure-JAX reference (mirrors the PyTorch forward) for validation
# ----------------------------------------------------------------------------
def unishrink_reference(x, H_taps, lamb, b, p, a1, a2, c, s):
    H_taps = jnp.asarray(H_taps, jnp.float32)
    kh, kw = H_taps.shape
    ph, pw = kh // 2, kw // 2
    Hh, Ww = x.shape[2], x.shape[3]
    xs = x - s
    xq = xs * xs
    xq_pad = jnp.pad(xq, ((0, 0), (0, 0), (ph, ph), (pw, pw)), mode="reflect")
    conv = jnp.full_like(x, b)
    for i in range(kh):
        for j in range(kw):
            conv = conv + H_taps[i, j] * xq_pad[:, :, i:i + Hh, j:j + Ww]
    denom = jnp.sqrt(conv)
    m1 = jnp.nan_to_num(1.0 - jnp.power(lamb / denom, p), nan=0.0)
    m1i = jnp.nan_to_num(1.0 / m1, nan=0.0)
    maxim = jnp.maximum(m1, 0.0)
    return xs * maxim * (a1 + a2 * m1i) + c


if __name__ == "__main__":
    key = jax.random.PRNGKey(0)
    x = jax.random.normal(key, (2, 4, 16, 16), dtype=jnp.float32)

    # Case 1: separable (uniform box) taps, p=2 -> reciprocal fast path.
    H1 = np.full((3, 3), 1.0 / 9.0, dtype=np.float32)
    args1 = dict(lamb=0.5, b=0.01, p=2.0, a1=1.0, a2=0.1, c=0.0, s=0.1)
    out1 = jax.block_until_ready(unishrink_forward(x, H1, **args1))
    ref1 = unishrink_reference(x, H1, **args1)
    np.testing.assert_allclose(np.asarray(out1), np.asarray(ref1),
                               rtol=2e-4, atol=2e-4)

    # Case 2: non-separable asymmetric taps, p=4 -> even-power path + grouping.
    H2 = np.array([[0.05, 0.10, 0.03],
                   [0.08, 0.30, 0.07],
                   [0.02, 0.12, 0.06]], dtype=np.float32)
    args2 = dict(lamb=0.4, b=0.02, p=4.0, a1=0.9, a2=0.2, c=0.05, s=-0.05)
    out2 = jax.block_until_ready(unishrink_forward(x, H2, **args2))
    ref2 = unishrink_reference(x, H2, **args2)
    np.testing.assert_allclose(np.asarray(out2), np.asarray(ref2),
                               rtol=2e-4, atol=2e-4)

    # Case 3: non-integer p -> single log + exp fallback path.
    args3 = dict(lamb=0.6, b=0.01, p=2.5, a1=1.1, a2=0.05, c=-0.02, s=0.0)
    out3 = jax.block_until_ready(unishrink_forward(x, H1, **args3))
    ref3 = unishrink_reference(x, H1, **args3)
    np.testing.assert_allclose(np.asarray(out3), np.asarray(ref3),
                               rtol=2e-4, atol=2e-4)

    print("KERNEL_OK")
</pallas_src>

<mosaic_0001>
module attributes {stable_mosaic.version = 11 : i64} {
  func.func @kernel(%arg0: i32, %arg1: memref<7xf32, #tpu.memory_space<smem>>, %arg2: memref<1x256xi32, #tpu.memory_space<vmem>>, %arg3: memref<1x256xi32, #tpu.memory_space<vmem>>, %arg4: memref<1x8x256xf32, #tpu.memory_space<vmem>>, %arg5: memref<1x8x256xf32, #tpu.memory_space<vmem>>) attributes {dimension_semantics = [#tpu.dimension_semantics<parallel>], iteration_bounds = array<i64: 1>, scalar_prefetch = 0 : i64, scratch_operands = 0 : i64, tpu.core_type = #tpu.core_type<tc>, window_params = [{transform_indices = @transform_0, window_bounds = array<i64: 7>}, {pipeline_mode = #tpu.pipeline_mode<synchronous>, transform_indices = @transform_1, window_bounds = array<i64: 1, 256>}, {pipeline_mode = #tpu.pipeline_mode<synchronous>, transform_indices = @transform_2, window_bounds = array<i64: 1, 256>}, {transform_indices = @transform_3, window_bounds = array<i64: 1, 8, 256>}, {transform_indices = @transform_4, window_bounds = array<i64: 1, 8, 256>}]} {
    %c0 = arith.constant 0 : index
    %0 = memref.load %arg1[%c0] : memref<7xf32, #tpu.memory_space<smem>>
    %c1 = arith.constant 1 : index
    %1 = memref.load %arg1[%c1] : memref<7xf32, #tpu.memory_space<smem>>
    %c2 = arith.constant 2 : index
    %2 = memref.load %arg1[%c2] : memref<7xf32, #tpu.memory_space<smem>>
    %c3 = arith.constant 3 : index
    %3 = memref.load %arg1[%c3] : memref<7xf32, #tpu.memory_space<smem>>
    %c4 = arith.constant 4 : index
    %4 = memref.load %arg1[%c4] : memref<7xf32, #tpu.memory_space<smem>>
    %c5 = arith.constant 5 : index
    %5 = memref.load %arg1[%c5] : memref<7xf32, #tpu.memory_space<smem>>
    %c0_0 = arith.constant 0 : index
    %c0_1 = arith.constant 0 : index
    %6 = vector.load %arg2[%c0_0, %c0_1] : memref<1x256xi32, #tpu.memory_space<vmem>>, vector<1x256xi32>
    %7 = vector.shape_cast %6 : vector<1x256xi32> to vector<1x256xi32>
    %8 = vector.broadcast %7 : vector<1x256xi32> to vector<8x256xi32>
    %c0_2 = arith.constant 0 : index
    %c0_3 = arith.constant 0 : index
    %9 = vector.load %arg3[%c0_2, %c0_3] : memref<1x256xi32, #tpu.memory_space<vmem>>, vector<1x256xi32>
    %10 = vector.shape_cast %9 : vector<1x256xi32> to vector<1x256xi32>
    %11 = vector.broadcast %10 : vector<1x256xi32> to vector<8x256xi32>
    %c0_4 = arith.constant 0 : index
    %c0_5 = arith.constant 0 : index
    %c0_6 = arith.constant 0 : index
    %12 = vector.load %arg4[%c0_4, %c0_5, %c0_6] : memref<1x8x256xf32, #tpu.memory_space<vmem>>, vector<1x8x256xf32>
    %13 = vector.shape_cast %12 : vector<1x8x256xf32> to vector<8x256xf32>
    %14 = vector.broadcast %4 : f32 to vector<8x256xf32>
    %15 = arith.subf %13, %14 : vector<8x256xf32>
    %16 = arith.mulf %15, %15 : vector<8x256xf32>
    %c1_i32 = arith.constant 1 : i32
    %17 = tpu.dynamic_rotate %16 by %c1_i32 dim 1 : vector<8x256xf32>, i32 -> vector<8x256xf32>
    %c0_i32 = arith.constant 0 : i32
    %18 = vector.broadcast %c0_i32 : i32 to vector<8x256xi32>
    %19 = arith.cmpi eq, %11, %18 : vector<8x256xi32>
    %c255_i32 = arith.constant 255 : i32
    %20 = tpu.dynamic_rotate %16 by %c255_i32 dim 1 : vector<8x256xf32>, i32 -> vector<8x256xf32>
    %21 = arith.select %19, %20, %17 : vector<8x256xi1>, vector<8x256xf32>
    %c15_i32 = arith.constant 15 : i32
    %22 = vector.broadcast %c15_i32 : i32 to vector<8x256xi32>
    %23 = arith.cmpi eq, %11, %22 : vector<8x256xi32>
    %24 = arith.select %23, %17, %20 : vector<8x256xi1>, vector<8x256xf32>
    %25 = arith.addf %21, %24 : vector<8x256xf32>
    %cst = arith.constant -0.333333343 : f32
    %26 = vector.broadcast %cst : f32 to vector<8x256xf32>
    %27 = arith.mulf %26, %25 : vector<8x256xf32>
    %cst_7 = arith.constant -0.333333343 : f32
    %28 = vector.broadcast %cst_7 : f32 to vector<8x256xf32>
    %29 = arith.mulf %28, %16 : vector<8x256xf32>
    %30 = arith.addf %27, %29 : vector<8x256xf32>
    %c16_i32 = arith.constant 16 : i32
    %31 = tpu.dynamic_rotate %30 by %c16_i32 dim 1 : vector<8x256xf32>, i32 -> vector<8x256xf32>
    %c0_i32_8 = arith.constant 0 : i32
    %32 = vector.broadcast %c0_i32_8 : i32 to vector<8x256xi32>
    %33 = arith.cmpi eq, %8, %32 : vector<8x256xi32>
    %c240_i32 = arith.constant 240 : i32
    %34 = tpu.dynamic_rotate %30 by %c240_i32 dim 1 : vector<8x256xf32>, i32 -> vector<8x256xf32>
    %35 = arith.select %33, %34, %31 : vector<8x256xi1>, vector<8x256xf32>
    %c15_i32_9 = arith.constant 15 : i32
    %36 = vector.broadcast %c15_i32_9 : i32 to vector<8x256xi32>
    %37 = arith.cmpi eq, %8, %36 : vector<8x256xi32>
    %38 = arith.select %37, %31, %34 : vector<8x256xi1>, vector<8x256xf32>
    %39 = arith.addf %35, %30 : vector<8x256xf32>
    %40 = arith.addf %39, %38 : vector<8x256xf32>
    %cst_10 = arith.constant -0.333333343 : f32
    %41 = vector.broadcast %cst_10 : f32 to vector<8x256xf32>
    %42 = arith.mulf %41, %40 : vector<8x256xf32>
    %43 = vector.broadcast %0 : f32 to vector<8x256xf32>
    %44 = arith.addf %42, %43 : vector<8x256xf32>
    %45 = tpu.reciprocal %44 {approx = true} : vector<8x256xf32> -> vector<8x256xf32>
    %46 = arith.mulf %44, %45 : vector<8x256xf32>
    %cst_11 = arith.constant 2.000000e+00 : f32
    %47 = vector.broadcast %cst_11 : f32 to vector<8x256xf32>
    %48 = arith.subf %47, %46 : vector<8x256xf32>
    %49 = arith.mulf %45, %48 : vector<8x256xf32>
    %50 = vector.broadcast %5 : f32 to vector<8x256xf32>
    %51 = arith.mulf %50, %49 : vector<8x256xf32>
    %cst_12 = arith.constant 1.000000e+00 : f32
    %52 = vector.broadcast %cst_12 : f32 to vector<8x256xf32>
    %53 = arith.subf %52, %51 : vector<8x256xf32>
    %cst_13 = arith.constant 0.000000e+00 : f32
    %54 = vector.broadcast %cst_13 : f32 to vector<8x256xf32>
    %55 = arith.cmpf ogt, %44, %54 : vector<8x256xf32>
    %cst_14 = arith.constant 0.000000e+00 : f32
    %56 = vector.broadcast %cst_14 : f32 to vector<8x256xf32>
    %57 = arith.cmpf ogt, %53, %56 : vector<8x256xf32>
    %58 = arith.andi %55, %57 : vector<8x256xi1>
    %59 = vector.broadcast %1 : f32 to vector<8x256xf32>
    %60 = arith.mulf %59, %53 : vector<8x256xf32>
    %61 = vector.broadcast %2 : f32 to vector<8x256xf32>
    %62 = arith.addf %60, %61 : vector<8x256xf32>
    %63 = arith.mulf %15, %62 : vector<8x256xf32>
    %64 = vector.broadcast %3 : f32 to vector<8x256xf32>
    %65 = arith.addf %63, %64 : vector<8x256xf32>
    %66 = vector.broadcast %3 : f32 to vector<8x256xf32>
    %67 = arith.select %58, %65, %66 : vector<8x256xi1>, vector<8x256xf32>
    %c0_15 = arith.constant 0 : index
    %c0_16 = arith.constant 0 : index
    %c0_17 = arith.constant 0 : index
    %68 = vector.load %arg5[%c0_15, %c0_16, %c0_17] : memref<1x8x256xf32, #tpu.memory_space<vmem>>, vector<1x8x256xf32>
    %69 = vector.shape_cast %68 : vector<1x8x256xf32> to vector<8x256xf32>
    %70 = vector.shape_cast %67 : vector<8x256xf32> to vector<1x8x256xf32>
    tpu.vector_store %arg5[%c0_15, %c0_16, %c0_17], %70 {strides = array<i32>} : memref<1x8x256xf32, #tpu.memory_space<vmem>>, vector<1x8x256xf32>,
    return
  }
  func.func @transform_0(%arg0: i32) -> i32 {
    %c0_i32 = arith.constant 0 : i32
    %c0_i32_0 = arith.constant 0 : i32
    return %c0_i32 : i32
  }
  func.func @transform_1(%arg0: i32) -> (i32, i32) {
    %c0_i32 = arith.constant 0 : i32
    %c0_i32_0 = arith.constant 0 : i32
    %c0_i32_1 = arith.constant 0 : i32
    return %c0_i32, %c0_i32_0 : i32, i32
  }
  func.func @transform_2(%arg0: i32) -> (i32, i32) {
    %c0_i32 = arith.constant 0 : i32
    %c0_i32_0 = arith.constant 0 : i32
    %c0_i32_1 = arith.constant 0 : i32
    return %c0_i32, %c0_i32_0 : i32, i32
  }
  func.func @transform_3(%arg0: i32) -> (i32, i32, i32) {
    %c0_i32 = arith.constant 0 : i32
    %c0_i32_0 = arith.constant 0 : i32
    %c0_i32_1 = arith.constant 0 : i32
    return %arg0, %c0_i32, %c0_i32_0 : i32, i32, i32
  }
  func.func @transform_4(%arg0: i32) -> (i32, i32, i32) {
    %c0_i32 = arith.constant 0 : i32
    %c0_i32_0 = arith.constant 0 : i32
    %c0_i32_1 = arith.constant 0 : i32
    return %arg0, %c0_i32, %c0_i32_0 : i32, i32, i32
  }
}

</mosaic_0001>

<llo_original>
// kernel: tpu_custom_call.1
$region0: #{tpu_custom_call.1}
  #allocation0 [shape = 'u32[]', space=smem, size = 0x4, offset = 0x4, fixed_abs, tag = 'smem constant byte address 0x4 - core index']
  #allocation1 [shape = 'u32[144,128]{1,0:T(1,128)}', space=vmem, size = 0x12000, scoped, tag = 'internal scratch']
  %s0 = inlined_call_operand.hbm [shape: f32[7], index: 0, kind: input, shape index: {}]
  %s1 = inlined_call_operand.vmem [shape: s32[1,256], index: 1, kind: input, shape index: {}]
  %s2 = inlined_call_operand.vmem [shape: s32[1,256], index: 2, kind: input, shape index: {}]
  %s3 = inlined_call_operand.hbm [shape: f32[1,8,256], index: 3, kind: input, shape index: {}]
  %s4 = inlined_call_operand.hbm [shape: f32[1,8,256], index: 4, kind: output, shape index: {}]
  %s5 = sld [smem:[#allocation0]]
  $region34: #{tpu_custom_call.1} parent=0
    _
  %s7 = ssub.s32 1, %s5
  %s8 = scalar_select 0, %s7, %s5
  $region1: #{tpu_custom_call.1} parent=0
    #allocation2 [shape = 'u8[512]{0}', space=smem, size = 0x200, scoped, tag = 'input window, operand 0, single buffered']
    #allocation3 [shape = 's32[1]{0}', space=sflag, size = 0x4, scoped, tag = 'scoped memory for tpu_custom_call.1']
    #allocation4 [shape = 's32[1]{0}', space=sflag, size = 0x4, scoped, tag = 'scoped memory for tpu_custom_call.1']
    #allocation5 [shape = 's32[1]{0}', space=sflag, size = 0x4, scoped, tag = 'scoped memory for tpu_custom_call.1']
    #allocation6 [shape = 'u8[8192]{0}', space=vmem, size = 0x2000, scoped, tag = 'input window, operand 3, single buffered']
    #allocation7 [shape = 'u8[8192]{0}', space=vmem, size = 0x2000, scoped, tag = 'output window, operand 0, single buffered']
    %9 = vsyncpa [#allocation5], 0
    %10 = vsyncpa [#allocation3], 0
    %11 = vsyncpa [#allocation4], 0
    // Predicated region
    $region2: #{tpu_custom_call.1} parent=1 // pred_check
      _
    $region3: #{tpu_custom_call.1} parent=1 // pred_check_branch
      %13 = sbr.rel (0) target = $region5
    $region4: #{tpu_custom_call.1} parent=1 // pred_region
      %s15 = ssub.s32 16, 16
      %16 = vsyncadd [#allocation5], %s15
      %19 = dma.hbm_to_smem %s0, 16, [#allocation2], [#allocation5]
    $region5: #{tpu_custom_call.1} parent=1 // pred_fallthru
      _
    // Predicated region
    $region6: #{tpu_custom_call.1} parent=1 // pred_check
      _
    $region7: #{tpu_custom_call.1} parent=1 // pred_check_branch
      %21 = sbr.rel (0) target = $region9
    $region8: #{tpu_custom_call.1} parent=1 // pred_region
      _
    $region9: #{tpu_custom_call.1} parent=1 // pred_fallthru
      _
    // Predicated region
    $region10: #{tpu_custom_call.1} parent=1 // pred_check
      _
    $region11: #{tpu_custom_call.1} parent=1 // pred_check_branch
      %23 = sbr.rel (0) target = $region13
    $region12: #{tpu_custom_call.1} parent=1 // pred_region
      _
    $region13: #{tpu_custom_call.1} parent=1 // pred_fallthru
      _
    // Predicated region
    $region14: #{tpu_custom_call.1} parent=1 // pred_check
      _
    $region15: #{tpu_custom_call.1} parent=1 // pred_check_branch
      %25 = sbr.rel (0) target = $region17
    $region16: #{tpu_custom_call.1} parent=1 // pred_region
      %s27 = ssub.s32 256, 256
      %28 = vsyncadd [#allocation3], %s27
      %s30 = sshll.u32 [#allocation6], 4
      %s31 = int_to_ptr.vmem [resolvable:$true] %s30
      %33 = dma.hbm_to_vmem [thread:$0]  %s3, 256, %s31, [#allocation3]
    $region17: #{tpu_custom_call.1} parent=1 // pred_fallthru
      _
    // Predicated region
    $region18: #{tpu_custom_call.1} parent=1 // pred_check
      _
    $region19: #{tpu_custom_call.1} parent=1 // pred_check_branch
      %35 = sbr.rel (0) target = $region21
    $region20: #{tpu_custom_call.1} parent=1 // pred_region
      %36 = dma.done [#allocation5], 16
    $region21: #{tpu_custom_call.1} parent=1 // pred_fallthru
      _
    // Predicated region
    $region22: #{tpu_custom_call.1} parent=1 // pred_check
      _
    $region23: #{tpu_custom_call.1} parent=1 // pred_check_branch
      %38 = sbr.rel (0) target = $region25
    $region24: #{tpu_custom_call.1} parent=1 // pred_region
      %39 = dma.done [#allocation3], 256
    $region25: #{tpu_custom_call.1} parent=1 // pred_fallthru
      _
    %40 = sfence
    %s41 = sld [smem:[#allocation2]]
    %s42 = sld [smem:[#allocation2 + $0x1]]
    %s43 = sld [smem:[#allocation2 + $0x2]]
    %s44 = sld [smem:[#allocation2 + $0x3]]
    %s45 = sld [smem:[#allocation2 + $0x4]]
    %s46 = sld [smem:[#allocation2 + $0x5]]
    %v47 = vld [vmem:[%s1] sm:$0x3]
    %v48 = vlaneseq
    %v49 = vshrl.u32 %v48, 7
    %v50 = vsub.s32 0, %v49
    %v51 = vrot.slane %v47, %v50
    %v52 = vlaneseq
    %v53 = vshrl.u32 %v52, 7
    %v54 = vsub.s32 1, %v53
    %v55 = vrot.slane %v47, %v54
    %v56 = vld [vmem:[%s2] sm:$0x3]
    %v57 = vlaneseq
    %v58 = vshrl.u32 %v57, 7
    %v59 = vsub.s32 0, %v58
    %v60 = vrot.slane %v56, %v59
    %v61 = vlaneseq
    %v62 = vshrl.u32 %v61, 7
    %v63 = vsub.s32 1, %v62
    %v64 = vrot.slane %v56, %v63
    %v65 = vld [vmem:[#allocation6] sm:$0xff]
    %v66 = vld [vmem:[#allocation6 + $0x8] sm:$0xff]
    %v67 = vstv %s45
    %v68 = vsub.f32 %v65, %v67
    %v69 = vsub.f32 %v66, %v67
    %v70 = vmul.f32 %v68, %v68
    %v71 = vmul.f32 %v69, %v69
    %72 = vrot.lane.b32.xlu0 %v70, 1
    %v73 = vpop.permute.xlu0 %72
    %74 = vrot.lane.b32.xlu0 %v71, 1
    %v75 = vpop.permute.xlu0 %74
    %v76 = vlaneseq
    %v77 = vand.u32 %v76, 127
    %vm78 = vcmp.lt.s32.totalorder %v77, 1
    %v79 = vsel %vm78, %v73, %v75
    %v80 = vsel %vm78, %v75, %v73
    %vm81 = vcmp.eq.s32.totalorder %v60, 0
    %vm82 = vcmp.eq.s32.totalorder %v64, 0
    %83 = vrot.lane.b32.xlu0 %v70, 127
    %v84 = vpop.permute.xlu0 %83
    %85 = vrot.lane.b32.xlu0 %v71, 127
    %v86 = vpop.permute.xlu0 %85
    %vm87 = vcmp.lt.s32.totalorder %v77, 127
    %v88 = vsel %vm87, %v84, %v86
    %v89 = vsel %vm87, %v86, %v84
    %v90 = vsel %vm81, %v88, %v80
    %v91 = vsel %vm82, %v89, %v79
    %vm92 = vcmp.eq.s32.totalorder %v60, 15
    %vm93 = vcmp.eq.s32.totalorder %v64, 15
    %v94 = vsel %vm92, %v80, %v88
    %v95 = vsel %vm93, %v79, %v89
    %v96 = vadd.f32 %v90, %v94
    %v97 = vadd.f32 %v91, %v95
    %v98 = vmul.f32 %v96, -0.33333334
    %v99 = vmul.f32 %v97, -0.33333334
    %v100 = vmul.f32 %v70, -0.33333334
    %v101 = vmul.f32 %v71, -0.33333334
    %v102 = vadd.f32 %v98, %v100
    %v103 = vadd.f32 %v99, %v101
    %104 = vrot.lane.b32.xlu0 %v102, 16
    %v105 = vpop.permute.xlu0 %104
    %106 = vrot.lane.b32.xlu0 %v103, 16
    %v107 = vpop.permute.xlu0 %106
    %vm108 = vcmp.lt.s32.totalorder %v77, 16
    %v109 = vsel %vm108, %v105, %v107
    %v110 = vsel %vm108, %v107, %v105
    %vm111 = vcmp.eq.s32.totalorder %v51, 0
    %vm112 = vcmp.eq.s32.totalorder %v55, 0
    %113 = vrot.lane.b32.xlu0 %v102, 112
    %v114 = vpop.permute.xlu0 %113
    %115 = vrot.lane.b32.xlu0 %v103, 112
    %v116 = vpop.permute.xlu0 %115
    %vm117 = vcmp.lt.s32.totalorder %v77, 112
    %v118 = vsel %vm117, %v114, %v116
    %v119 = vsel %vm117, %v116, %v114
    %v120 = vsel %vm111, %v118, %v110
    %v121 = vsel %vm112, %v119, %v109
    %vm122 = vcmp.eq.s32.totalorder %v51, 15
    %vm123 = vcmp.eq.s32.totalorder %v55, 15
    %v124 = vsel %vm122, %v110, %v118
    %v125 = vsel %vm123, %v109, %v119
    %v126 = vadd.f32 %v120, %v102
    %v127 = vadd.f32 %v121, %v103
    %v128 = vadd.f32 %v126, %v124
    %v129 = vadd.f32 %v127, %v125
    %v130 = vmul.f32 %v128, -0.33333334
    %v131 = vmul.f32 %v129, -0.33333334
    %v132 = vstv %s41
    %v133 = vadd.f32 %v130, %v132
    %v134 = vadd.f32 %v131, %v132
    %v135 = vrcp.pop %v133
    %v136 = vrcp.pop %v134
    %v137 = vmul.f32 %v133, %v135
    %v138 = vmul.f32 %v134, %v136
    %v139 = vsub.f32 2.0, %v137
    %v140 = vsub.f32 2.0, %v138
    %v141 = vmul.f32 %v135, %v139
    %v142 = vmul.f32 %v136, %v140
    %v143 = vstv %s46
    %v144 = vmul.f32 %v143, %v141
    %v145 = vmul.f32 %v143, %v142
    %v146 = vsub.f32 1.0, %v144
    %v147 = vsub.f32 1.0, %v145
    %vm148 = vcmp.gt.f32.partialorder %v133, 0.0
    %vm149 = vcmp.gt.f32.partialorder %v134, 0.0
    %vm150 = vcmp.gt.f32.partialorder %v146, 0.0
    %vm151 = vcmp.gt.f32.partialorder %v147, 0.0
    %vm152 = vmand %vm148, %vm150
    %vm153 = vmand %vm149, %vm151
    %v154 = vstv %s42
    %v155 = vmul.f32 %v154, %v146
    %v156 = vmul.f32 %v154, %v147
    %v157 = vstv %s43
    %v158 = vadd.f32 %v155, %v157
    %v159 = vadd.f32 %v156, %v157
    %v160 = vmul.f32 %v68, %v158
    %v161 = vmul.f32 %v69, %v159
    %v162 = vstv %s44
    %v163 = vadd.f32 %v160, %v162
    %v164 = vadd.f32 %v161, %v162
    %v165 = vsel %vm152, %v163, %v162
    %v166 = vsel %vm153, %v164, %v162
    %167 = vst [vmem:[#allocation7] sm:$0xff] %v165
    %168 = vst [vmem:[#allocation7 + $0x8] sm:$0xff] %v166
    // Predicated region
    $region26: #{tpu_custom_call.1} parent=1 // pred_check
      _
    $region27: #{tpu_custom_call.1} parent=1 // pred_check_branch
      %170 = sbr.rel (0) target = $region29
    $region28: #{tpu_custom_call.1} parent=1 // pred_region
      %s172 = ssub.s32 256, 256
      %173 = vsyncadd [#allocation4], %s172
      %s175 = sshll.u32 [#allocation7], 4
      %s176 = int_to_ptr.vmem [resolvable:$true] %s175
      %178 = dma.vmem_to_hbm [thread:$0]  %s176, 256, %s4, [#allocation4]
    $region29: #{tpu_custom_call.1} parent=1 // pred_fallthru
      _
    // Predicated region
    $region30: #{tpu_custom_call.1} parent=1 // pred_check
      _
    $region31: #{tpu_custom_call.1} parent=1 // pred_check_branch
      %180 = sbr.rel (0) target = $region33
    $region32: #{tpu_custom_call.1} parent=1 // pred_region
      %181 = dma.done [#allocation4], 256
    $region33: #{tpu_custom_call.1} parent=1 // pred_fallthru
      _
    %182 = vsyncpa [#allocation3], 1
    %183 = vsyncpa [#allocation4], 1
    %184 = vsyncpa [#allocation5], 1

</llo_original>
